<compile_context>
chip_gen: v5e
topology: v5e:2x2
jax: 0.10.0
libtpu: 0.0.40
codegen_flags: <defaults>
</compile_context>

<pallas_src>
import functools

import jax
import jax.numpy as jnp
from jax.experimental import pallas as pl
from jax.experimental.pallas import tpu as pltpu

# Explicit scoped-VMEM budget: above the 16/32 MiB defaults, comfortably below
# v7x's 64 MiB physical (and far below v5e/v6e's 128 MiB).
_VMEM_LIMIT = 48 * 1024 * 1024


def _compiler_params(*semantics):
    return pltpu.CompilerParams(dimension_semantics=tuple(semantics),
                                vmem_limit_bytes=_VMEM_LIMIT)


# ----------------------------------------------------------------------------
# Tiling helpers
# ----------------------------------------------------------------------------
def _tile_and_grid(dim, target, multiple):
    """(tile, n_blocks) for a data-parallel axis.  Prefers an exact aligned
    divisor <= target; otherwise uses an aligned tile with a cdiv grid (Pallas
    masks the ragged edge block).  Never falls back to the full extent, so
    awkward shapes cannot blow up the VMEM footprint."""
    if dim <= target:
        return dim, 1
    for t in range(target, multiple - 1, -1):
        if t % multiple == 0 and dim % t == 0:
            return t, dim // t
    t = max((target // multiple) * multiple, multiple)
    return t, pl.cdiv(dim, t)


def _exact_tile(dim, target, multiple):
    """Exact aligned divisor <= target, else the full extent.  Used for axes
    that are reduced over / dynamically sliced (padding would be incorrect)."""
    if dim <= target:
        return dim
    for t in range(target, multiple - 1, -1):
        if t % multiple == 0 and dim % t == 0:
            return t
    return dim


# ----------------------------------------------------------------------------
# In-kernel helpers
# ----------------------------------------------------------------------------
def _gelu_tanh_f32(x):
    # tanh-form GELU: the tanh goes to the EUP slot instead of loading the
    # VALU with a long erfc polynomial.  (Approximation of torch.nn.GELU.)
    c = 0.7978845608028654  # sqrt(2/pi)
    return 0.5 * x * (1.0 + jnp.tanh(c * (x + 0.044715 * x * x * x)))


# ----------------------------------------------------------------------------
# Kernels
# ----------------------------------------------------------------------------
def _dense_kernel(x_ref, w_ref, b_ref, o_ref, *, activation):
    # y = x @ W + b (optional GELU).  bf16 operands into the MXU, f32 acc.
    acc = jnp.dot(x_ref[...], w_ref[...], preferred_element_type=jnp.float32)
    acc = acc + b_ref[...].astype(jnp.float32)
    if activation == "gelu":
        acc = _gelu_tanh_f32(acc)
    o_ref[...] = acc.astype(o_ref.dtype)


def _dense_add_ln_kernel(x_ref, w_ref, b_ref, r_ref, g_ref, be_ref, o_ref,
                         acc_ref, *, eps):
    # Fused: h = x @ W + b + residual ; out = LayerNorm(h) * gamma + beta
    # K is the (optional) reduction grid axis; epilogue runs on the last step.
    k = pl.program_id(1)

    @pl.when(k == 0)
    def _():
        acc_ref[...] = jnp.zeros_like(acc_ref)

    acc_ref[...] += jnp.dot(x_ref[...], w_ref[...],
                            preferred_element_type=jnp.float32)

    @pl.when(k == pl.num_programs(1) - 1)
    def _():
        h = (acc_ref[...] + b_ref[...].astype(jnp.float32)
             + r_ref[...].astype(jnp.float32))
        mean = jnp.mean(h, axis=-1, keepdims=True)
        c = h - mean
        var = jnp.mean(c * c, axis=-1, keepdims=True)
        y = c * jax.lax.rsqrt(var + eps)
        o_ref[...] = (y * g_ref[...].astype(jnp.float32)
                      + be_ref[...].astype(jnp.float32)).astype(o_ref.dtype)


def _add_ln_kernel(x_ref, r_ref, g_ref, b_ref, o_ref, *, eps):
    h = x_ref[...].astype(jnp.float32) + r_ref[...].astype(jnp.float32)
    mean = jnp.mean(h, axis=-1, keepdims=True)
    c = h - mean
    var = jnp.mean(c * c, axis=-1, keepdims=True)
    y = c * jax.lax.rsqrt(var + eps)
    o_ref[...] = (y * g_ref[...].astype(jnp.float32)
                  + b_ref[...].astype(jnp.float32)).astype(o_ref.dtype)


def _attn_kernel(qkv_ref, m_ref, o_ref, *, num_heads, head_dim, hidden, scale, tq):
    # qkv_ref: (S, 3H) for one batch element (block resident across query
    #          tiles, re-DMA'd only when the batch index changes).
    # m_ref:   (1, S) additive key mask.   o_ref: (tq, H), lane-dense.
    # TODO(synk): for very long sequences add a KV grid axis with an online
    #             (flash-style) softmax so the (tq, S) score block stays bounded.
    q_start = pl.multiple_of(pl.program_id(1) * tq, tq)
    q_rows = qkv_ref[pl.ds(q_start, tq), :]        # (tq, 3H) query-row tile
    kv_all = qkv_ref[...]                          # (S, 3H)
    mask = m_ref[...].astype(jnp.float32)          # (1, S) broadcasts over queries
    ctxs = []
    for h in range(num_heads):
        q_sl = slice(h * head_dim, (h + 1) * head_dim)
        k_sl = slice(hidden + h * head_dim, hidden + (h + 1) * head_dim)
        v_sl = slice(2 * hidden + h * head_dim, 2 * hidden + (h + 1) * head_dim)
        q = q_rows[:, q_sl] * scale                # fold 1/sqrt(D) into q
        k = kv_all[:, k_sl]
        v = kv_all[:, v_sl]
        s = jax.lax.dot_general(q, k, (((1,), (1,)), ((), ())),
                                preferred_element_type=jnp.float32)
        s = s + mask
        s_max = jnp.max(s, axis=-1, keepdims=True)
        p = jnp.exp(s - s_max)
        denom = jnp.sum(p, axis=-1, keepdims=True)
        ctx = jax.lax.dot_general(p.astype(v.dtype), v, (((1,), (0,)), ((), ())),
                                  preferred_element_type=jnp.float32)
        ctxs.append(ctx * pl.reciprocal(denom, approx=True))   # EUP slot
    # Single lane-dense full-width store (no per-head masked partial stores).
    o_ref[...] = jnp.concatenate(ctxs, axis=-1).astype(o_ref.dtype)


def _tied_head_kernel(x_ref, w_ref, o_ref):
    # logits = x @ embed.T, contracting the hidden dim of both operands
    # (no transposed weight copy is ever materialized).
    o_ref[...] = jax.lax.dot_general(
        x_ref[...], w_ref[...],
        dimension_numbers=(((1,), (1,)), ((), ())),
        preferred_element_type=jnp.float32,
    ).astype(o_ref.dtype)


# ----------------------------------------------------------------------------
# Pallas wrappers
# ----------------------------------------------------------------------------
def dense(x, w, b, activation=None, *, tm_target=512, tn_target=512):
    M, K = x.shape
    Kw, N = w.shape
    assert K == Kw
    tm, gm = _tile_and_grid(M, tm_target, 8)
    tn, gn = _tile_and_grid(N, tn_target, 128)
    kernel = functools.partial(_dense_kernel, activation=activation)
    # Weight-stationary grid: N (weight columns) outer, rows inner -> the
    # (K, tn) weight block index is constant across the inner axis, so Pallas
    # skips its re-DMA and the full weight streams from HBM only once.
    return pl.pallas_call(
        kernel,
        out_shape=jax.ShapeDtypeStruct((M, N), x.dtype),
        grid=(gn, gm),
        in_specs=[
            pl.BlockSpec((tm, K), lambda j, i: (i, 0)),
            pl.BlockSpec((K, tn), lambda j, i: (0, j)),
            pl.BlockSpec((1, tn), lambda j, i: (0, j)),
        ],
        out_specs=pl.BlockSpec((tm, tn), lambda j, i: (i, j)),
        compiler_params=_compiler_params("parallel", "parallel"),
    )(x, w, b.reshape(1, N))


def dense_add_ln(x, w, b, res, gamma, beta, eps=1e-12, *,
                 tm_target=256, tk_target=512,
                 resident_weight_budget=24 * 1024 * 1024):
    # Fused matmul + bias + residual add + LayerNorm.  N (= hidden) stays whole
    # per block because the LayerNorm reduces over it; K is tiled only when the
    # double-buffered weight would not fit a conservative VMEM budget (v7x).
    M, K = x.shape
    Kw, N = w.shape
    assert K == Kw and res.shape == (M, N)
    tm, gm = _tile_and_grid(M, tm_target, 8)
    if 2 * K * N * w.dtype.itemsize <= resident_weight_budget:
        tk = K                               # weight fully resident, one DMA
    else:
        tk = _exact_tile(K, tk_target, 128)  # K-tiled reduction w/ accumulator
    gk = K // tk
    kernel = functools.partial(_dense_add_ln_kernel, eps=eps)
    return pl.pallas_call(
        kernel,
        out_shape=jax.ShapeDtypeStruct((M, N), x.dtype),
        grid=(gm, gk),
        in_specs=[
            pl.BlockSpec((tm, tk), lambda i, k: (i, k)),
            pl.BlockSpec((tk, N), lambda i, k: (k, 0)),
            pl.BlockSpec((1, N), lambda i, k: (0, 0)),
            pl.BlockSpec((tm, N), lambda i, k: (i, 0)),
            pl.BlockSpec((1, N), lambda i, k: (0, 0)),
            pl.BlockSpec((1, N), lambda i, k: (0, 0)),
        ],
        out_specs=pl.BlockSpec((tm, N), lambda i, k: (i, 0)),
        scratch_shapes=[pltpu.VMEM((tm, N), jnp.float32)],
        compiler_params=_compiler_params("parallel", "arbitrary"),
    )(x, w, b.reshape(1, N), res, gamma.reshape(1, N), beta.reshape(1, N))


def add_layernorm(x, res, gamma, beta, eps=1e-12, *, tm_target=512):
    M, H = x.shape
    tm, gm = _tile_and_grid(M, tm_target, 8)
    kernel = functools.partial(_add_ln_kernel, eps=eps)
    return pl.pallas_call(
        kernel,
        out_shape=jax.ShapeDtypeStruct((M, H), x.dtype),
        grid=(gm,),
        in_specs=[
            pl.BlockSpec((tm, H), lambda i: (i, 0)),
            pl.BlockSpec((tm, H), lambda i: (i, 0)),
            pl.BlockSpec((1, H), lambda i: (0, 0)),
            pl.BlockSpec((1, H), lambda i: (0, 0)),
        ],
        out_specs=pl.BlockSpec((tm, H), lambda i: (i, 0)),
        compiler_params=_compiler_params("parallel"),
    )(x, res, gamma.reshape(1, H), beta.reshape(1, H))


def multi_head_attention(qkv, add_mask, *, num_heads, head_dim, hidden, scale,
                         tq_target=256):
    # qkv: [B, S, 3H] fused projections; add_mask: [B, 1, S] additive key mask.
    B, S, _ = qkv.shape
    tq = _exact_tile(S, tq_target, 8)
    kernel = functools.partial(_attn_kernel, num_heads=num_heads,
                               head_dim=head_dim, hidden=hidden, scale=scale,
                               tq=tq)
    return pl.pallas_call(
        kernel,
        out_shape=jax.ShapeDtypeStruct((B, S, hidden), qkv.dtype),
        grid=(B, S // tq),
        in_specs=[
            pl.BlockSpec((None, S, 3 * hidden), lambda b, qi: (b, 0, 0)),
            pl.BlockSpec((None, 1, S), lambda b, qi: (b, 0, 0)),
        ],
        out_specs=pl.BlockSpec((None, tq, hidden), lambda b, qi: (b, qi, 0)),
        compiler_params=_compiler_params("parallel", "parallel"),
    )(qkv, add_mask)


def tied_head(x, embed, *, tm_target=512, tn_target=1024):
    # logits = x @ embed.T with the untransposed [vocab, H] embedding.
    # Vocab axis outer: the (tn, H) embedding tile index is constant across the
    # inner row axis, so the big embedding matrix streams from HBM exactly once
    # and only the small activation tile is revisited.
    # TODO(synk): int8 embedding weights would further help v5e/v6e (not v7x).
    M, H = x.shape
    V, He = embed.shape
    assert H == He
    tm, gm = _tile_and_grid(M, tm_target, 8)
    tn, gn = _tile_and_grid(V, tn_target, 128)
    return pl.pallas_call(
        _tied_head_kernel,
        out_shape=jax.ShapeDtypeStruct((M, V), jnp.float32),
        grid=(gn, gm),
        in_specs=[
            pl.BlockSpec((tm, H), lambda j, i: (i, 0)),
            pl.BlockSpec((tn, H), lambda j, i: (j, 0)),
        ],
        out_specs=pl.BlockSpec((tm, tn), lambda j, i: (i, j)),
        compiler_params=_compiler_params("parallel", "parallel"),
    )(x, embed)


# ----------------------------------------------------------------------------
# Parameters (deterministic synthetic init, mirrors BERT4Rec.__init__ shapes)
# ----------------------------------------------------------------------------
def init_params(key, vocab, hidden, layers, intermediate, max_pos, std=0.02):
    keys = iter(jax.random.split(key, 4 + layers * 4))
    dt = jnp.bfloat16   # bf16 storage; all kernels accumulate / normalize in f32

    def nrm(shape):
        return (std * jax.random.normal(next(keys), shape, jnp.float32)).astype(dt)

    embed = nrm((vocab, hidden)).at[0].set(0.0)  # padding_idx=0 row zeroed
    params = dict(
        embed=embed,
        pos_emb=nrm((max_pos, hidden)),
        tok_emb=nrm((2, hidden)),
        emb_ln_g=jnp.ones((hidden,), dt),
        emb_ln_b=jnp.zeros((hidden,), dt),
        layers=[],
    )
    for _ in range(layers):
        lp = dict(
            # fused Q/K/V projection: [H, 3H] weight, [3H] bias
            wqkv=nrm((hidden, 3 * hidden)),
            bqkv=jnp.zeros((3 * hidden,), dt),
            wo=nrm((hidden, hidden)), bo=jnp.zeros((hidden,), dt),
            ln1_g=jnp.ones((hidden,), dt), ln1_b=jnp.zeros((hidden,), dt),
            wi=nrm((hidden, intermediate)), bi=jnp.zeros((intermediate,), dt),
            wf=nrm((intermediate, hidden)), bf=jnp.zeros((hidden,), dt),
            ln2_g=jnp.ones((hidden,), dt), ln2_b=jnp.zeros((hidden,), dt),
        )
        params["layers"].append(lp)
    return params


# ----------------------------------------------------------------------------
# Forward pass (BERT4Rec: embeddings -> BertModel encoder -> tied head)
# ----------------------------------------------------------------------------
def bert4rec_forward(params, input_ids, attention_mask, *, num_heads):
    B, S = input_ids.shape
    H = params["embed"].shape[1]
    D = H // num_heads

    # --- BertEmbeddings: word + position + token_type(0), then LayerNorm ---
    # TODO(synk): the token-id gather stays in plain JAX (no rectangular tiling).
    word = params["embed"][input_ids]                       # [B, S, H] gather
    pos_tok = params["pos_emb"][:S] + params["tok_emb"][0]  # [S, H]
    res = jnp.broadcast_to(pos_tok, (B, S, H))
    x = add_layernorm(word.reshape(B * S, H), res.reshape(B * S, H),
                      params["emb_ln_g"], params["emb_ln_b"])          # [B*S, H] bf16

    # extended attention mask: (1 - mask) * -10000, applied to key positions
    add_mask = ((1.0 - attention_mask.astype(jnp.float32)) * -10000.0).reshape(B, 1, S)
    scale = 1.0 / (D ** 0.5)

    # --- Bert encoder layers ---
    for lp in params["layers"]:
        qkv = dense(x, lp["wqkv"], lp["bqkv"])                         # [B*S, 3H]
        ctx = multi_head_attention(qkv.reshape(B, S, 3 * H), add_mask,
                                   num_heads=num_heads, head_dim=D,
                                   hidden=H, scale=scale)              # [B, S, H]
        ctx = ctx.reshape(B * S, H)
        # attention output projection fused with bias + residual + LayerNorm
        x_attn = dense_add_ln(ctx, lp["wo"], lp["bo"], x, lp["ln1_g"], lp["ln1_b"])
        # FFN: up-proj + GELU, then down-proj fused with residual + LayerNorm
        inter = dense(x_attn, lp["wi"], lp["bi"], activation="gelu")
        x = dense_add_ln(inter, lp["wf"], lp["bf"], x_attn, lp["ln2_g"], lp["ln2_b"])

    # --- head: Linear(hidden, vocab, bias=False), weight tied to embedding ---
    logits = tied_head(x, params["embed"])                             # f32
    return logits.reshape(B, S, -1)


# ----------------------------------------------------------------------------
if __name__ == "__main__":
    vocab_size = 64
    bert_config = dict(
        hidden_size=32,
        num_hidden_layers=2,
        num_attention_heads=2,
        intermediate_size=64,
        max_position_embeddings=16,
    )
    B, S = 2, 8

    key = jax.random.PRNGKey(0)
    pkey, ikey = jax.random.split(key)
    params = init_params(
        pkey, vocab_size, bert_config["hidden_size"],
        bert_config["num_hidden_layers"], bert_config["intermediate_size"],
        bert_config["max_position_embeddings"],
    )

    input_ids = jax.random.randint(ikey, (B, S), 1, vocab_size, dtype=jnp.int32)
    attention_mask = jnp.array([[1] * 8, [1] * 5 + [0] * 3], dtype=jnp.int32)

    out = bert4rec_forward(params, input_ids, attention_mask,
                           num_heads=bert_config["num_attention_heads"])
    out = jax.block_until_ready(out)
    assert out.shape == (B, S, vocab_size)
    assert bool(jnp.all(jnp.isfinite(out)))
    print("KERNEL_OK")
</pallas_src>

<mosaic_0001>
module attributes {stable_mosaic.version = 11 : i64} {
  func.func @_add_ln_kernel(%arg0: i32, %arg1: memref<16x32xbf16, #tpu.memory_space<vmem>>, %arg2: memref<16x32xbf16, #tpu.memory_space<vmem>>, %arg3: memref<1x32xbf16, #tpu.memory_space<vmem>>, %arg4: memref<1x32xbf16, #tpu.memory_space<vmem>>, %arg5: memref<16x32xbf16, #tpu.memory_space<vmem>>) attributes {dimension_semantics = [#tpu.dimension_semantics<parallel>], iteration_bounds = array<i64: 1>, scalar_prefetch = 0 : i64, scratch_operands = 0 : i64, tpu.core_type = #tpu.core_type<tc>, window_params = [{transform_indices = @transform_0, window_bounds = array<i64: 16, 32>}, {transform_indices = @transform_1, window_bounds = array<i64: 16, 32>}, {pipeline_mode = #tpu.pipeline_mode<synchronous>, transform_indices = @transform_2, window_bounds = array<i64: 1, 32>}, {pipeline_mode = #tpu.pipeline_mode<synchronous>, transform_indices = @transform_3, window_bounds = array<i64: 1, 32>}, {transform_indices = @transform_4, window_bounds = array<i64: 16, 32>}]} {
    %c0 = arith.constant 0 : index
    %c0_0 = arith.constant 0 : index
    %0 = vector.load %arg1[%c0, %c0_0] : memref<16x32xbf16, #tpu.memory_space<vmem>>, vector<16x32xbf16>
    %1 = arith.extf %0 : vector<16x32xbf16> to vector<16x32xf32>
    %c0_1 = arith.constant 0 : index
    %c0_2 = arith.constant 0 : index
    %2 = vector.load %arg2[%c0_1, %c0_2] : memref<16x32xbf16, #tpu.memory_space<vmem>>, vector<16x32xbf16>
    %3 = arith.extf %2 : vector<16x32xbf16> to vector<16x32xf32>
    %4 = arith.addf %1, %3 : vector<16x32xf32>
    %cst = arith.constant dense<0.000000e+00> : vector<16xf32>
    %5 = vector.multi_reduction <add>, %4, %cst [1] : vector<16x32xf32> to vector<16xf32>
    %6 = vector.shape_cast %5 : vector<16xf32> to vector<16x1xf32>
    %cst_3 = arith.constant 3.200000e+01 : f32
    %7 = vector.broadcast %cst_3 : f32 to vector<16x1xf32>
    %8 = arith.divf %6, %7 : vector<16x1xf32>
    %9 = vector.broadcast %8 : vector<16x1xf32> to vector<16x32xf32>
    %10 = arith.subf %4, %9 : vector<16x32xf32>
    %11 = arith.mulf %10, %10 : vector<16x32xf32>
    %cst_4 = arith.constant dense<0.000000e+00> : vector<16xf32>
    %12 = vector.multi_reduction <add>, %11, %cst_4 [1] : vector<16x32xf32> to vector<16xf32>
    %13 = vector.shape_cast %12 : vector<16xf32> to vector<16x1xf32>
    %cst_5 = arith.constant 3.200000e+01 : f32
    %14 = vector.broadcast %cst_5 : f32 to vector<16x1xf32>
    %15 = arith.divf %13, %14 : vector<16x1xf32>
    %cst_6 = arith.constant 9.99999996E-13 : f32
    %16 = vector.broadcast %cst_6 : f32 to vector<16x1xf32>
    %17 = arith.addf %15, %16 : vector<16x1xf32>
    %18 = math.rsqrt %17 : vector<16x1xf32>
    %19 = vector.broadcast %18 : vector<16x1xf32> to vector<16x32xf32>
    %20 = arith.mulf %10, %19 : vector<16x32xf32>
    %c0_7 = arith.constant 0 : index
    %c0_8 = arith.constant 0 : index
    %21 = vector.load %arg3[%c0_7, %c0_8] : memref<1x32xbf16, #tpu.memory_space<vmem>>, vector<1x32xbf16>
    %22 = arith.extf %21 : vector<1x32xbf16> to vector<1x32xf32>
    %23 = vector.broadcast %22 : vector<1x32xf32> to vector<16x32xf32>
    %24 = arith.mulf %20, %23 : vector<16x32xf32>
    %c0_9 = arith.constant 0 : index
    %c0_10 = arith.constant 0 : index
    %25 = vector.load %arg4[%c0_9, %c0_10] : memref<1x32xbf16, #tpu.memory_space<vmem>>, vector<1x32xbf16>
    %26 = arith.extf %25 : vector<1x32xbf16> to vector<1x32xf32>
    %27 = vector.broadcast %26 : vector<1x32xf32> to vector<16x32xf32>
    %28 = arith.addf %24, %27 : vector<16x32xf32>
    %29 = arith.truncf %28 : vector<16x32xf32> to vector<16x32xbf16>
    %c0_11 = arith.constant 0 : index
    %c0_12 = arith.constant 0 : index
    %30 = vector.load %arg5[%c0_11, %c0_12] : memref<16x32xbf16, #tpu.memory_space<vmem>>, vector<16x32xbf16>
    tpu.vector_store %arg5[%c0_11, %c0_12], %29 {strides = array<i32>} : memref<16x32xbf16, #tpu.memory_space<vmem>>, vector<16x32xbf16>,
    return
  }
  func.func @transform_0(%arg0: i32) -> (i32, i32) {
    %c0_i32 = arith.constant 0 : i32
    %c0_i32_0 = arith.constant 0 : i32
    return %arg0, %c0_i32 : i32, i32
  }
  func.func @transform_1(%arg0: i32) -> (i32, i32) {
    %c0_i32 = arith.constant 0 : i32
    %c0_i32_0 = arith.constant 0 : i32
    return %arg0, %c0_i32 : i32, i32
  }
  func.func @transform_2(%arg0: i32) -> (i32, i32) {
    %c0_i32 = arith.constant 0 : i32
    %c0_i32_0 = arith.constant 0 : i32
    %c0_i32_1 = arith.constant 0 : i32
    return %c0_i32, %c0_i32_0 : i32, i32
  }
  func.func @transform_3(%arg0: i32) -> (i32, i32) {
    %c0_i32 = arith.constant 0 : i32
    %c0_i32_0 = arith.constant 0 : i32
    %c0_i32_1 = arith.constant 0 : i32
    return %c0_i32, %c0_i32_0 : i32, i32
  }
  func.func @transform_4(%arg0: i32) -> (i32, i32) {
    %c0_i32 = arith.constant 0 : i32
    %c0_i32_0 = arith.constant 0 : i32
    return %arg0, %c0_i32 : i32, i32
  }
}

</mosaic_0001>

<llo_original>
// kernel: tpu_custom_call.1
$region0: #{tpu_custom_call.1}
  #allocation0 [shape = 'u32[]', space=smem, size = 0x4, offset = 0x4, fixed_abs, tag = 'smem constant byte address 0x4 - core index']
  #allocation1 [shape = 'u32[72,128]{1,0:T(1,128)}', space=vmem, size = 0x9000, scoped, tag = 'internal scratch']
  %s0 = inlined_call_operand.hbm [shape: bf16[16,32], index: 0, kind: input, shape index: {}]
  %s1 = inlined_call_operand.hbm [shape: bf16[16,32], index: 1, kind: input, shape index: {}]
  %s2 = inlined_call_operand.vmem [shape: bf16[1,32], index: 2, kind: input, shape index: {}]
  %s3 = inlined_call_operand.vmem [shape: bf16[1,32], index: 3, kind: input, shape index: {}]
  %s4 = inlined_call_operand.hbm [shape: bf16[16,32], index: 4, kind: output, shape index: {}]
  %s5 = sld [smem:[#allocation0]]
  $region34: #{tpu_custom_call.1} parent=0
    _
  %s7 = ssub.s32 1, %s5
  %s8 = scalar_select 0, %s7, %s5
  $region1: #{tpu_custom_call.1} parent=0
    #allocation2 [shape = 'u8[4096]{0}', space=vmem, size = 0x1000, scoped, tag = 'input window, operand 0, single buffered']
    #allocation3 [shape = 's32[1]{0}', space=sflag, size = 0x4, scoped, tag = 'scoped memory for tpu_custom_call.1']
    #allocation4 [shape = 's32[1]{0}', space=sflag, size = 0x4, scoped, tag = 'scoped memory for tpu_custom_call.1']
    #allocation5 [shape = 'u8[4096]{0}', space=vmem, size = 0x1000, scoped, tag = 'input window, operand 1, single buffered']
    #allocation6 [shape = 's32[1]{0}', space=sflag, size = 0x4, scoped, tag = 'scoped memory for tpu_custom_call.1']
    #allocation7 [shape = 'u8[4096]{0}', space=vmem, size = 0x1000, scoped, tag = 'output window, operand 0, single buffered']
    %9 = vsyncpa [#allocation3], 0
    %10 = vsyncpa [#allocation6], 0
    %11 = vsyncpa [#allocation4], 0
    // Predicated region
    $region2: #{tpu_custom_call.1} parent=1 // pred_check
      _
    $region3: #{tpu_custom_call.1} parent=1 // pred_check_branch
      %13 = sbr.rel (0) target = $region5
    $region4: #{tpu_custom_call.1} parent=1 // pred_region
      %15 = vsyncadd [#allocation3], 0
      %s16 = sshll.u32 %s0, 4
      %s17 = int_to_ptr.hbm [resolvable:$true] %s16
      %s18 = sshll.u32 [#allocation2], 4
      %s19 = int_to_ptr.vmem [resolvable:$true] %s18
      %24 = dma.hbm_to_vmem [thread:$0]  %s17, 128, %s19, [#allocation3], 64, 64, 4
    $region5: #{tpu_custom_call.1} parent=1 // pred_fallthru
      _
    // Predicated region
    $region6: #{tpu_custom_call.1} parent=1 // pred_check
      _
    $region7: #{tpu_custom_call.1} parent=1 // pred_check_branch
      %26 = sbr.rel (0) target = $region9
    $region8: #{tpu_custom_call.1} parent=1 // pred_region
      %28 = vsyncadd [#allocation6], 0
      %s29 = sshll.u32 %s1, 4
      %s30 = int_to_ptr.hbm [resolvable:$true] %s29
      %s31 = sshll.u32 [#allocation5], 4
      %s32 = int_to_ptr.vmem [resolvable:$true] %s31
      %37 = dma.hbm_to_vmem [thread:$0]  %s30, 128, %s32, [#allocation6], 64, 64, 4
    $region9: #{tpu_custom_call.1} parent=1 // pred_fallthru
      _
    // Predicated region
    $region10: #{tpu_custom_call.1} parent=1 // pred_check
      _
    $region11: #{tpu_custom_call.1} parent=1 // pred_check_branch
      %39 = sbr.rel (0) target = $region13
    $region12: #{tpu_custom_call.1} parent=1 // pred_region
      _
    $region13: #{tpu_custom_call.1} parent=1 // pred_fallthru
      _
    // Predicated region
    $region14: #{tpu_custom_call.1} parent=1 // pred_check
      _
    $region15: #{tpu_custom_call.1} parent=1 // pred_check_branch
      %41 = sbr.rel (0) target = $region17
    $region16: #{tpu_custom_call.1} parent=1 // pred_region
      _
    $region17: #{tpu_custom_call.1} parent=1 // pred_fallthru
      _
    // Predicated region
    $region18: #{tpu_custom_call.1} parent=1 // pred_check
      _
    $region19: #{tpu_custom_call.1} parent=1 // pred_check_branch
      %43 = sbr.rel (0) target = $region21
    $region20: #{tpu_custom_call.1} parent=1 // pred_region
      %45 = dma.done [#allocation3], 128
    $region21: #{tpu_custom_call.1} parent=1 // pred_fallthru
      _
    // Predicated region
    $region22: #{tpu_custom_call.1} parent=1 // pred_check
      _
    $region23: #{tpu_custom_call.1} parent=1 // pred_check_branch
      %47 = sbr.rel (0) target = $region25
    $region24: #{tpu_custom_call.1} parent=1 // pred_region
      %49 = dma.done [#allocation6], 128
    $region25: #{tpu_custom_call.1} parent=1 // pred_fallthru
      _
    %v50 = vld [vmem:[#allocation2] sm:$0xf]
    %v51 = vld [vmem:[#allocation2 + $0x4] sm:$0xf]
    %v52 = vunpack.c.l.bf16 %v50
    %v53 = vunpack.c.l.bf16 %v51
    %v54 = vld [vmem:[#allocation5] sm:$0xf]
    %v55 = vld [vmem:[#allocation5 + $0x4] sm:$0xf]
    %v56 = vunpack.c.l.bf16 %v54
    %v57 = vunpack.c.l.bf16 %v55
    %v58 = vadd.f32 %v52, %v56
    %v59 = vadd.f32 %v53, %v57
    %vm60 = vcmask 261120
    %v61 = vsel %vm60, %v58, 0.0
    %62 = vadd.xlane.f32.xlu0 %v61
    %v63 = vpop.xlane.xlu0 %62
    %v64 = vsel %vm60, %v59, 0.0
    %65 = vadd.xlane.f32.xlu0 %v64
    %v66 = vpop.xlane.xlu0 %65
    %v67 = vrcp.pop 32.0
    %v68 = vmul.f32 32.0, %v67
    %v69 = vsub.f32 1.0, %v68
    %v70 = vmul.f32 %v67, %v69
    %v71 = vadd.f32 %v67, %v70
    %vm72 = vweird.f32 %v67
    %v73 = vsel %vm72, %v67, %v71
    %v74 = vmul.f32 %v63, %v73
    %v75 = vmul.f32 %v66, %v73
    %v76 = vsub.f32 %v58, %v74
    %v77 = vsub.f32 %v59, %v75
    %v78 = vmul.f32 %v76, %v76
    %v79 = vmul.f32 %v77, %v77
    %v80 = vsel %vm60, %v78, 0.0
    %81 = vadd.xlane.f32.xlu0 %v80
    %v82 = vpop.xlane.xlu0 %81
    %v83 = vsel %vm60, %v79, 0.0
    %84 = vadd.xlane.f32.xlu0 %v83
    %v85 = vpop.xlane.xlu0 %84
    %v86 = vmul.f32 %v82, %v73
    %v87 = vmul.f32 %v85, %v73
    %v88 = vadd.f32 %v86, 1e-12
    %v89 = vadd.f32 %v87, 1e-12
    %v90 = vrsqrt.pop %v88
    %v91 = vmul.f32 %v90, %v88
    %v92 = vmul.f32 %v91, %v90
    %v93 = vmul.f32 0.5, %v92
    %v94 = vsub.f32 1.5, %v93
    %v95 = vmul.f32 %v90, %v94
    %vm96 = vweird.f32 %v88
    %vm97 = vweird.f32 %v90
    %vm98 = vmor %vm96, %vm97
    %v99 = vsel %vm98, %v90, %v95
    %v100 = vrsqrt.pop %v89
    %v101 = vmul.f32 %v100, %v89
    %v102 = vmul.f32 %v101, %v100
    %v103 = vmul.f32 0.5, %v102
    %v104 = vsub.f32 1.5, %v103
    %v105 = vmul.f32 %v100, %v104
    %vm106 = vweird.f32 %v89
    %vm107 = vweird.f32 %v100
    %vm108 = vmor %vm106, %vm107
    %v109 = vsel %vm108, %v100, %v105
    %v110 = vmul.f32 %v76, %v99
    %v111 = vmul.f32 %v77, %v109
    %v112 = vld [vmem:[%s2] sm:$0x1]
    %v113 = vunpack.c.l.bf16 %v112
    %v114 = vperm.slane %v113, 0
    %v115 = vmul.f32 %v110, %v114
    %v116 = vmul.f32 %v111, %v114
    %v117 = vld [vmem:[%s3] sm:$0x1]
    %v118 = vunpack.c.l.bf16 %v117
    %v119 = vperm.slane %v118, 0
    %v120 = vadd.f32 %v115, %v119
    %v121 = vadd.f32 %v116, %v119
    %v122 = vpack.c.bf16 %v120, %v120
    %v123 = vpack.c.bf16 %v121, %v121
    %vm124 = vcmask 257024
    %125 = vst.msk [vmem:[#allocation7] sm:$0xf] %vm124, %v122
    %126 = vst.msk [vmem:[#allocation7 + $0x4] sm:$0xf] %vm124, %v123
    // Predicated region
    $region26: #{tpu_custom_call.1} parent=1 // pred_check
      _
    $region27: #{tpu_custom_call.1} parent=1 // pred_check_branch
      %128 = sbr.rel (0) target = $region29
    $region28: #{tpu_custom_call.1} parent=1 // pred_region
      %130 = vsyncadd [#allocation4], 0
      %s131 = sshll.u32 [#allocation7], 4
      %s132 = int_to_ptr.vmem [resolvable:$true] %s131
      %s133 = sshll.u32 %s4, 4
      %s134 = int_to_ptr.hbm [resolvable:$true] %s133
      %139 = dma.vmem_to_hbm [thread:$0]  %s132, 128, %s134, [#allocation4], 64, 64, 4
    $region29: #{tpu_custom_call.1} parent=1 // pred_fallthru
      _
    // Predicated region
    $region30: #{tpu_custom_call.1} parent=1 // pred_check
      _
    $region31: #{tpu_custom_call.1} parent=1 // pred_check_branch
      %141 = sbr.rel (0) target = $region33
    $region32: #{tpu_custom_call.1} parent=1 // pred_region
      %143 = dma.done [#allocation4], 128
    $region33: #{tpu_custom_call.1} parent=1 // pred_fallthru
      _
    %144 = vsyncpa [#allocation3], 1
    %145 = vsyncpa [#allocation6], 1
    %146 = vsyncpa [#allocation4], 1

</llo_original>
